<compile_context>
chip_gen: v7x
topology: tpu7x:2x2x1
jax: 0.10.0
libtpu: 0.0.40
codegen_flags: <defaults>
</compile_context>

<pallas_src>
import jax
import jax.numpy as jnp
from jax.experimental import pallas as pl
from jax.experimental.pallas import tpu as pltpu


def _actor_critic_kernel(x_ref, w1_ref, b1_ref, wh_ref, bh_ref, out_ref):
    # hidden = relu(x @ W1 + b1)   (bf16 operands, f32 accumulation)
    h = jnp.dot(x_ref[...], w1_ref[...], preferred_element_type=jnp.float32)
    h = jnp.maximum(h + b1_ref[...], 0.0)

    # one fused head matmul: columns [0, A) are policy logits, column A is value
    heads = jnp.dot(h, wh_ref[...], preferred_element_type=jnp.float32) + bh_ref[...]

    a1 = out_ref.shape[-1]          # A + 1 (static)
    a = a1 - 1
    col = jax.lax.broadcasted_iota(jnp.int32, heads.shape, 1)
    is_policy = col < a

    # masked softmax over the policy columns only; value column passes through.
    m = jnp.max(jnp.where(is_policy, heads, -jnp.inf), axis=-1, keepdims=True)
    e = jnp.exp(jnp.where(is_policy, heads - m, -jnp.inf))   # exp(-inf) = 0
    denom = jnp.sum(e, axis=-1, keepdims=True)               # >= 1
    policy = e / denom                                        # exact reciprocal

    out_ref[...] = jnp.where(is_policy, policy, heads).astype(out_ref.dtype)


def fuse_head_params(params):
    """Build the fused-head parameter dict once (outside the kernel)."""
    w_heads = jnp.concatenate([params["wp"], params["wv"]], axis=1)   # [H, A+1]
    b_heads = jnp.concatenate([params["bp"], params["bv"]], axis=1)   # [1, A+1]
    return {"w1": params["w1"], "b1": params["b1"],
            "wh": w_heads, "bh": b_heads}


def _round_up(x, m):
    return ((x + m - 1) // m) * m


def actor_critic_a2c(state, fused_params, *, max_tile=4096,
                     input_dtype=jnp.bfloat16):
    """Forward pass. state: [B, input_size]. Returns (policy [B, A], value [B, 1])."""
    w1, b1, wh, bh = (fused_params["w1"], fused_params["b1"],
                      fused_params["wh"], fused_params["bh"])
    B, in_size = state.shape
    H = w1.shape[1]
    A1 = wh.shape[1]          # A + 1; must stay inside one 128-lane tile
    assert 2 <= A1 <= 128, "need action_size >= 1 and A+1 <= 128"

    # bf16 on the dominant HBM read (state) + W1 so the first matmul is a
    # native bf16 MXU op; accumulation stays f32 via preferred_element_type.
    state = state.astype(input_dtype)
    w1 = w1.astype(input_dtype)

    # Batch tiling: large tiles (multiple of 8 sublanes) to amortize the
    # ~0.35 us per-grid-step overhead.  If more than one step is needed, use an
    # even step count so both v7x TensorCores are fed on the "parallel" axis.
    b_sub = _round_up(B, 8)
    if b_sub <= max_tile:
        tm = b_sub
        steps = 1
    else:
        steps = -(-b_sub // max_tile)
        if steps % 2:
            steps += 1
        tm = _round_up(-(-b_sub // steps), 8)
    B_pad = steps * tm
    if B_pad != B:
        state = jnp.pad(state, ((0, B_pad - B), (0, 0)))

    resident = dict(pipeline_mode=pl.Buffered(1))   # grid-invariant: 1 buffer

    out = pl.pallas_call(
        _actor_critic_kernel,
        out_shape=jax.ShapeDtypeStruct((B_pad, A1), jnp.float32),
        grid=(steps,),
        in_specs=[
            pl.BlockSpec((tm, in_size), lambda i: (i, 0)),             # x tiled over batch
            pl.BlockSpec((in_size, H), lambda i: (0, 0), **resident),  # weights stay VMEM-resident
            pl.BlockSpec((1, H), lambda i: (0, 0), **resident),
            pl.BlockSpec((H, A1), lambda i: (0, 0), **resident),
            pl.BlockSpec((1, A1), lambda i: (0, 0), **resident),
        ],
        out_specs=pl.BlockSpec((tm, A1), lambda i: (i, 0)),
        compiler_params=pltpu.CompilerParams(
            dimension_semantics=("parallel",),          # megacore on v7x
            vmem_limit_bytes=32 * 1024 * 1024,          # headroom vs v5e 16 MiB default
        ),
    )(state, w1, b1, wh, bh)

    policy = out[:B, : A1 - 1]
    value = out[:B, A1 - 1:]
    return policy, value


def init_params(key, input_size, action_size, hidden_layer_size):
    """Deterministic init mimicking nn.Linear's uniform(-1/sqrt(fan_in), 1/sqrt(fan_in))."""
    ks = jax.random.split(key, 6)

    def lin(kw, kb, fan_in, fan_out):
        bound = 1.0 / jnp.sqrt(jnp.float32(fan_in))
        w = jax.random.uniform(kw, (fan_in, fan_out), jnp.float32, -bound, bound)
        b = jax.random.uniform(kb, (1, fan_out), jnp.float32, -bound, bound)
        return w, b

    w1, b1 = lin(ks[0], ks[1], input_size, hidden_layer_size)
    wp, bp = lin(ks[2], ks[3], hidden_layer_size, action_size)
    wv, bv = lin(ks[4], ks[5], hidden_layer_size, 1)
    return {"w1": w1, "b1": b1, "wp": wp, "bp": bp, "wv": wv, "bv": bv}


def reference_forward(state, params):
    h = jnp.maximum(state @ params["w1"] + params["b1"], 0.0)
    logits = h @ params["wp"] + params["bp"]
    policy = jax.nn.softmax(logits, axis=-1)
    value = h @ params["wv"] + params["bv"]
    return policy, value


if __name__ == "__main__":
    input_size = 16
    action_size = 4
    hidden_layer_size = 32
    batch = 8

    key = jax.random.PRNGKey(0)
    k_params, k_state = jax.random.split(key)
    params = init_params(k_params, input_size, action_size, hidden_layer_size)
    fused = fuse_head_params(params)   # concat heads once, outside the kernel
    state = jax.random.normal(k_state, (batch, input_size), jnp.float32)

    policy, value = actor_critic_a2c(state, fused)
    jax.block_until_ready((policy, value))

    # Sanity check against pure-JAX f32 reference.  The kernel runs the first
    # matmul with bf16 operands (f32 accumulation), so allow ~1e-2 slack on the
    # absolute values; the softmax normalization itself is exact in f32.
    ref_policy, ref_value = reference_forward(state, params)
    assert policy.shape == (batch, action_size)
    assert value.shape == (batch, 1)
    assert jnp.allclose(policy, ref_policy, atol=2e-2, rtol=2e-2)
    assert jnp.allclose(value, ref_value, atol=2e-2, rtol=2e-2)
    assert jnp.allclose(jnp.sum(policy, axis=-1), 1.0, atol=1e-5)

    print("KERNEL_OK")
</pallas_src>

<mosaic_0001>
module attributes {stable_mosaic.version = 11 : i64} {
  func.func @_actor_critic_kernel(%arg0: i32, %arg1: memref<8x16xbf16, #tpu.memory_space<vmem>>, %arg2: memref<16x32xbf16, #tpu.memory_space<vmem>>, %arg3: memref<1x32xf32, #tpu.memory_space<vmem>>, %arg4: memref<32x5xf32, #tpu.memory_space<vmem>>, %arg5: memref<1x5xf32, #tpu.memory_space<vmem>>, %arg6: memref<8x5xf32, #tpu.memory_space<vmem>>) attributes {dimension_semantics = [#tpu.dimension_semantics<parallel>], iteration_bounds = array<i64: 1>, scalar_prefetch = 0 : i64, scratch_operands = 0 : i64, tpu.core_type = #tpu.core_type<tc>, window_params = [{transform_indices = @transform_0, window_bounds = array<i64: 8, 16>}, {pipeline_mode = #tpu.pipeline_mode<synchronous>, transform_indices = @transform_1, window_bounds = array<i64: 16, 32>}, {pipeline_mode = #tpu.pipeline_mode<synchronous>, transform_indices = @transform_2, window_bounds = array<i64: 1, 32>}, {pipeline_mode = #tpu.pipeline_mode<synchronous>, transform_indices = @transform_3, window_bounds = array<i64: 32, 5>}, {pipeline_mode = #tpu.pipeline_mode<synchronous>, transform_indices = @transform_4, window_bounds = array<i64: 1, 5>}, {transform_indices = @transform_5, window_bounds = array<i64: 8, 5>}]} {
    %c0 = arith.constant 0 : index
    %c0_0 = arith.constant 0 : index
    %0 = vector.load %arg1[%c0, %c0_0] : memref<8x16xbf16, #tpu.memory_space<vmem>>, vector<8x16xbf16>
    %c0_1 = arith.constant 0 : index
    %c0_2 = arith.constant 0 : index
    %1 = vector.load %arg2[%c0_1, %c0_2] : memref<16x32xbf16, #tpu.memory_space<vmem>>, vector<16x32xbf16>
    %cst = arith.constant dense<0.000000e+00> : vector<8x32xf32>
    %2 = tpu.matmul %0, %1, %cst {dimension_numbers = #tpu.dot_dimension_numbers<[1], [0], [0], [1], [0, 0, 1, 1], [], []>} : vector<8x16xbf16>, vector<16x32xbf16>, vector<8x32xf32> -> vector<8x32xf32>
    %c0_3 = arith.constant 0 : index
    %c0_4 = arith.constant 0 : index
    %3 = vector.load %arg3[%c0_3, %c0_4] : memref<1x32xf32, #tpu.memory_space<vmem>>, vector<1x32xf32>
    %4 = vector.broadcast %3 : vector<1x32xf32> to vector<8x32xf32>
    %5 = arith.addf %2, %4 : vector<8x32xf32>
    %cst_5 = arith.constant 0.000000e+00 : f32
    %6 = vector.broadcast %cst_5 : f32 to vector<8x32xf32>
    %7 = arith.maximumf %5, %6 : vector<8x32xf32>
    %c0_6 = arith.constant 0 : index
    %c0_7 = arith.constant 0 : index
    %8 = vector.load %arg4[%c0_6, %c0_7] : memref<32x5xf32, #tpu.memory_space<vmem>>, vector<32x5xf32>
    %cst_8 = arith.constant dense<0.000000e+00> : vector<8x5xf32>
    %9 = tpu.matmul %7, %8, %cst_8 {dimension_numbers = #tpu.dot_dimension_numbers<[1], [0], [0], [1], [0, 0, 1, 1], [], []>} : vector<8x32xf32>, vector<32x5xf32>, vector<8x5xf32> -> vector<8x5xf32>
    %c0_9 = arith.constant 0 : index
    %c0_10 = arith.constant 0 : index
    %10 = vector.load %arg5[%c0_9, %c0_10] : memref<1x5xf32, #tpu.memory_space<vmem>>, vector<1x5xf32>
    %11 = vector.broadcast %10 : vector<1x5xf32> to vector<8x5xf32>
    %12 = arith.addf %9, %11 : vector<8x5xf32>
    %13 = tpu.iota {dimensions = array<i32: 1>} : vector<8x5xi32>
    %c4_i32 = arith.constant 4 : i32
    %14 = vector.broadcast %c4_i32 : i32 to vector<8x5xi32>
    %15 = arith.cmpi slt, %13, %14 : vector<8x5xi32>
    %cst_11 = arith.constant 0xFF800000 : f32
    %16 = vector.broadcast %cst_11 : f32 to vector<8x5xf32>
    %17 = arith.select %15, %12, %16 : vector<8x5xi1>, vector<8x5xf32>
    %cst_12 = arith.constant dense<0xFF800000> : vector<8xf32>
    %18 = vector.multi_reduction <maximumf>, %17, %cst_12 [1] : vector<8x5xf32> to vector<8xf32>
    %19 = vector.shape_cast %18 : vector<8xf32> to vector<8x1xf32>
    %20 = vector.broadcast %19 : vector<8x1xf32> to vector<8x5xf32>
    %21 = arith.subf %12, %20 : vector<8x5xf32>
    %cst_13 = arith.constant 0xFF800000 : f32
    %22 = vector.broadcast %cst_13 : f32 to vector<8x5xf32>
    %23 = arith.select %15, %21, %22 : vector<8x5xi1>, vector<8x5xf32>
    %24 = math.exp %23 : vector<8x5xf32>
    %cst_14 = arith.constant dense<0.000000e+00> : vector<8xf32>
    %25 = vector.multi_reduction <add>, %24, %cst_14 [1] : vector<8x5xf32> to vector<8xf32>
    %26 = vector.shape_cast %25 : vector<8xf32> to vector<8x1xf32>
    %27 = vector.broadcast %26 : vector<8x1xf32> to vector<8x5xf32>
    %28 = arith.divf %24, %27 : vector<8x5xf32>
    %29 = arith.select %15, %28, %12 : vector<8x5xi1>, vector<8x5xf32>
    %c0_15 = arith.constant 0 : index
    %c0_16 = arith.constant 0 : index
    %30 = vector.load %arg6[%c0_15, %c0_16] : memref<8x5xf32, #tpu.memory_space<vmem>>, vector<8x5xf32>
    tpu.vector_store %arg6[%c0_15, %c0_16], %29 {strides = array<i32>} : memref<8x5xf32, #tpu.memory_space<vmem>>, vector<8x5xf32>,
    return
  }
  func.func @transform_0(%arg0: i32) -> (i32, i32) {
    %c0_i32 = arith.constant 0 : i32
    %c0_i32_0 = arith.constant 0 : i32
    return %arg0, %c0_i32 : i32, i32
  }
  func.func @transform_1(%arg0: i32) -> (i32, i32) {
    %c0_i32 = arith.constant 0 : i32
    %c0_i32_0 = arith.constant 0 : i32
    %c0_i32_1 = arith.constant 0 : i32
    return %c0_i32, %c0_i32_0 : i32, i32
  }
  func.func @transform_2(%arg0: i32) -> (i32, i32) {
    %c0_i32 = arith.constant 0 : i32
    %c0_i32_0 = arith.constant 0 : i32
    %c0_i32_1 = arith.constant 0 : i32
    return %c0_i32, %c0_i32_0 : i32, i32
  }
  func.func @transform_3(%arg0: i32) -> (i32, i32) {
    %c0_i32 = arith.constant 0 : i32
    %c0_i32_0 = arith.constant 0 : i32
    %c0_i32_1 = arith.constant 0 : i32
    return %c0_i32, %c0_i32_0 : i32, i32
  }
  func.func @transform_4(%arg0: i32) -> (i32, i32) {
    %c0_i32 = arith.constant 0 : i32
    %c0_i32_0 = arith.constant 0 : i32
    %c0_i32_1 = arith.constant 0 : i32
    return %c0_i32, %c0_i32_0 : i32, i32
  }
  func.func @transform_5(%arg0: i32) -> (i32, i32) {
    %c0_i32 = arith.constant 0 : i32
    %c0_i32_0 = arith.constant 0 : i32
    return %arg0, %c0_i32 : i32, i32
  }
}

</mosaic_0001>

<llo_original>
// kernel: tpu_custom_call.1
$region0: #{tpu_custom_call.1}
  #allocation0 [shape = 'u32[]', space=smem, size = 0x4, offset = 0x4, fixed_abs, tag = 'smem constant byte address 0x4 - core index']
  #allocation1 [shape = 'u32[144,128]{1,0:T(1,128)}', space=vmem, size = 0x12000, scoped, tag = 'internal scratch']
  %s0 = inlined_call_operand.vmem [shape: bf16[8,16], index: 0, kind: input, shape index: {}]
  %s1 = inlined_call_operand.vmem [shape: bf16[16,32], index: 1, kind: input, shape index: {}]
  %s2 = inlined_call_operand.vmem [shape: f32[1,32], index: 2, kind: input, shape index: {}]
  %s3 = inlined_call_operand.vmem [shape: f32[32,5], index: 3, kind: input, shape index: {}]
  %s4 = inlined_call_operand.vmem [shape: f32[1,5], index: 4, kind: input, shape index: {}]
  %s5 = inlined_call_operand.hbm [shape: f32[8,5], index: 5, kind: output, shape index: {}]
  %s6 = sld [smem:[#allocation0]]
  $region30: #{tpu_custom_call.1} parent=0
    _
  %s8 = ssub.s32 1, %s6
  %s9 = scalar_select 0, %s8, %s6
  $region1: #{tpu_custom_call.1} parent=0
    #allocation2 [shape = 'u8[4096]{0}', space=vmem, size = 0x1000, scoped, tag = 'output window, operand 0, single buffered']
    #allocation3 [shape = 's32[1]{0}', space=sflag, size = 0x4, scoped, tag = 'scoped memory for tpu_custom_call.1']
    %10 = vsyncpa [#allocation3], 0
    // Predicated region
    $region2: #{tpu_custom_call.1} parent=1 // pred_check
      _
    $region3: #{tpu_custom_call.1} parent=1 // pred_check_branch
      %12 = sbr.rel (0) target = $region5
    $region4: #{tpu_custom_call.1} parent=1 // pred_region
      _
    $region5: #{tpu_custom_call.1} parent=1 // pred_fallthru
      _
    // Predicated region
    $region6: #{tpu_custom_call.1} parent=1 // pred_check
      _
    $region7: #{tpu_custom_call.1} parent=1 // pred_check_branch
      %14 = sbr.rel (0) target = $region9
    $region8: #{tpu_custom_call.1} parent=1 // pred_region
      _
    $region9: #{tpu_custom_call.1} parent=1 // pred_fallthru
      _
    // Predicated region
    $region10: #{tpu_custom_call.1} parent=1 // pred_check
      _
    $region11: #{tpu_custom_call.1} parent=1 // pred_check_branch
      %16 = sbr.rel (0) target = $region13
    $region12: #{tpu_custom_call.1} parent=1 // pred_region
      _
    $region13: #{tpu_custom_call.1} parent=1 // pred_fallthru
      _
    // Predicated region
    $region14: #{tpu_custom_call.1} parent=1 // pred_check
      _
    $region15: #{tpu_custom_call.1} parent=1 // pred_check_branch
      %18 = sbr.rel (0) target = $region17
    $region16: #{tpu_custom_call.1} parent=1 // pred_region
      _
    $region17: #{tpu_custom_call.1} parent=1 // pred_fallthru
      _
    // Predicated region
    $region18: #{tpu_custom_call.1} parent=1 // pred_check
      _
    $region19: #{tpu_custom_call.1} parent=1 // pred_check_branch
      %20 = sbr.rel (0) target = $region21
    $region20: #{tpu_custom_call.1} parent=1 // pred_region
      _
    $region21: #{tpu_custom_call.1} parent=1 // pred_fallthru
      _
    %v22 = vld [vmem:[%s0] sm:$0xf]
    %v23 = vld [vmem:[%s1] sm:$0xf]
    %v24 = vld [vmem:[%s1 + $0x4] sm:$0xf]
    %v25 = vld [vmem:[%s2] sm:$0x1]
    %v27 = vlaneseq
    %v28 = vshrl.u32 %v27, 7
    %v29 = vsub.s32 0, %v28
    %v30 = vrot.slane %v25, %v29
    %v34 = vunpack.c.l.b16 %v23
    %v35 = vunpack.c.l.b16 %v24
    %v36 = vpack.c.b16 %v35, %v34
    %vm38 = vcmask 130048
    %v40 = vsel %vm38, %v22, 0
    %42 = vmatprep.subr.bf16.mxu0 0
    %43 = vmatpush1.bf16.msra.mxu0 %v36
    %44 = vmatprep.subr.bf16.mxu0 0
    %45 = vmatpush1.bf16.msra.mxu0 0
    %46 = vmatprep.subr.bf16.mxu0 0
    %47 = vmatpush1.bf16.msra.mxu0 0
    %48 = vmatprep.subr.bf16.mxu0 0
    %49 = vmatpush1.bf16.msra.mxu0 0
    %50 = vmatprep.subr.bf16.mxu0 0
    %51 = vmatpush1.bf16.msra.mxu0 0
    %52 = vmatprep.subr.bf16.mxu0 0
    %53 = vmatpush1.bf16.msra.mxu0 0
    %54 = vmatprep.subr.bf16.mxu0 0
    %55 = vmatpush1.bf16.msra.mxu0 0
    %56 = vmatprep.subr.bf16.mxu0 0
    %57 = vmatpush1.bf16.msra.mxu0 0
    %58 = vmatprep.subr.bf16.mxu0 0
    %59 = vmatpush1.bf16.msra.mxu0 0
    %60 = vmatprep.subr.bf16.mxu0 0
    %61 = vmatpush1.bf16.msra.mxu0 0
    %62 = vmatprep.subr.bf16.mxu0 0
    %63 = vmatpush1.bf16.msra.mxu0 0
    %64 = vmatprep.subr.bf16.mxu0 0
    %65 = vmatpush1.bf16.msra.mxu0 0
    %66 = vmatprep.subr.bf16.mxu0 0
    %67 = vmatpush1.bf16.msra.mxu0 0
    %68 = vmatprep.subr.bf16.mxu0 0
    %69 = vmatpush1.bf16.msra.mxu0 0
    %70 = vmatprep.subr.bf16.mxu0 0
    %71 = vmatpush1.bf16.msra.mxu0 0
    %72 = vmatprep.subr.bf16.mxu0 0
    %73 = vmatpush1.bf16.msra.mxu0 0
    %74 = vmatprep.mubr.bf16.mxu0 0
    %75 = vmatmul.mubr.bf16.gmra.mrb[0].mxu0 %v40
    %v76 = vpop.f32.mrb[0].mxu0
    %v77 = vadd.f32 %v30, %v76
    %v78 = vpop.f32.mrb[0].mxu0
    %v79 = vpop.f32.mrb[0].mxu0
    %v80 = vpop.f32.mrb[0].mxu0
    %81 = vdwg.mxu0
    %v82 = vmax.f32 %v77, 0.0
    %v83 = vld [vmem:[%s3] sm:$0xff]
    %v84 = vld [vmem:[%s3 + $0x8] sm:$0xff]
    %v85 = vld [vmem:[%s3 + $0x10] sm:$0xff]
    %v86 = vld [vmem:[%s3 + $0x18] sm:$0xff]
    %v87 = vld [vmem:[%s4] sm:$0x1]
    %v89 = vlaneseq
    %v90 = vshrl.u32 %v89, 7
    %v91 = vsub.s32 0, %v90
    %v92 = vrot.slane %v87, %v91
    %vm94 = vcmask 261120
    %v96 = vsel %vm94, %v82, 0
    %98 = vmatprep.subr.mxu0 0.0
    %99 = vmatpush1.msra.mxu0 %v83
    %100 = vmatprep.subr.mxu0 0.0
    %101 = vmatpush1.msra.mxu0 %v84
    %102 = vmatprep.subr.mxu0 0.0
    %103 = vmatpush1.msra.mxu0 %v85
    %104 = vmatprep.subr.mxu0 0.0
    %105 = vmatpush1.msra.mxu0 %v86
    %106 = vmatprep.subr.mxu0 0.0
    %107 = vmatpush1.msra.mxu0 0.0
    %108 = vmatprep.subr.mxu0 0.0
    %109 = vmatpush1.msra.mxu0 0.0
    %110 = vmatprep.subr.mxu0 0.0
    %111 = vmatpush1.msra.mxu0 0.0
    %112 = vmatprep.subr.mxu0 0.0
    %113 = vmatpush1.msra.mxu0 0.0
    %114 = vmatprep.subr.mxu0 0.0
    %115 = vmatpush1.msra.mxu0 0.0
    %116 = vmatprep.subr.mxu0 0.0
    %117 = vmatpush1.msra.mxu0 0.0
    %118 = vmatprep.subr.mxu0 0.0
    %119 = vmatpush1.msra.mxu0 0.0
    %120 = vmatprep.subr.mxu0 0.0
    %121 = vmatpush1.msra.mxu0 0.0
    %122 = vmatprep.subr.mxu0 0.0
    %123 = vmatpush1.msra.mxu0 0.0
    %124 = vmatprep.subr.mxu0 0.0
    %125 = vmatpush1.msra.mxu0 0.0
    %126 = vmatprep.subr.mxu0 0.0
    %127 = vmatpush1.msra.mxu0 0.0
    %128 = vmatprep.subr.mxu0 0.0
    %129 = vmatpush1.msra.mxu0 0.0
    %130 = vmatprep.subr.mxu0 0.0
    %131 = vmatpush1.msra.mxu0 0.0
    %132 = vmatprep.subr.mxu0 0.0
    %133 = vmatpush1.msra.mxu0 0.0
    %134 = vmatprep.subr.mxu0 0.0
    %135 = vmatpush1.msra.mxu0 0.0
    %136 = vmatprep.subr.mxu0 0.0
    %137 = vmatpush1.msra.mxu0 0.0
    %138 = vmatprep.subr.mxu0 0.0
    %139 = vmatpush1.msra.mxu0 0.0
    %140 = vmatprep.subr.mxu0 0.0
    %141 = vmatpush1.msra.mxu0 0.0
    %142 = vmatprep.subr.mxu0 0.0
    %143 = vmatpush1.msra.mxu0 0.0
    %144 = vmatprep.subr.mxu0 0.0
    %145 = vmatpush1.msra.mxu0 0.0
    %146 = vmatprep.subr.mxu0 0.0
    %147 = vmatpush1.msra.mxu0 0.0
    %148 = vmatprep.subr.mxu0 0.0
    %149 = vmatpush1.msra.mxu0 0.0
    %150 = vmatprep.subr.mxu0 0.0
    %151 = vmatpush1.msra.mxu0 0.0
    %152 = vmatprep.subr.mxu0 0.0
    %153 = vmatpush1.msra.mxu0 0.0
    %154 = vmatprep.subr.mxu0 0.0
    %155 = vmatpush1.msra.mxu0 0.0
    %156 = vmatprep.subr.mxu0 0.0
    %157 = vmatpush1.msra.mxu0 0.0
    %158 = vmatprep.subr.mxu0 0.0
    %159 = vmatpush1.msra.mxu0 0.0
    %160 = vmatprep.subr.mxu0 0.0
    %161 = vmatpush1.msra.mxu0 0.0
    %162 = vmatprep.mubr.f32.mxu0 0.0
    %163 = vmatmul.mubr.f32.gmra.mrb[0].mxu0 %v96
    %v164 = vpop.f32.mrb[0].mxu0
    %v165 = vadd.f32 %v92, %v164
    %v166 = vpop.f32.mrb[0].mxu0
    %167 = vdwg.mxu0
    %v168 = vlaneseq
    %v169 = vand.u32 %v168, 127
    %vm170 = vcmp.lt.s32.totalorder %v169, 4
    %v171 = vsel %vm170, %v165, -inf
    %vm172 = vcmask 39936
    %v173 = vsel %vm172, %v171, -inf
    %174 = vmax.xlane.f32.xlu0 %v173
    %v175 = vpop.xlane.xlu0 %174
    %v176 = vsub.f32 %v165, %v175
    %v177 = vsel %vm170, %v176, -inf
    %v178 = vmul.f32 %v177, 1.442695
    %v179 = vpow.pop %v178
    %v180 = vsel %vm172, %v179, 0.0
    %181 = vadd.xlane.f32.xlu0 %v180
    %v182 = vpop.xlane.xlu0 %181
    %v183 = vrcp.pop %v182
    %v184 = vmul.f32 %v179, %v183
    %v185 = vsel %vm170, %v184, %v165
    %186 = vst.msk [vmem:[#allocation2] sm:$0xff] %vm172, %v185
    // Predicated region
    $region22: #{tpu_custom_call.1} parent=1 // pred_check
      _
    $region23: #{tpu_custom_call.1} parent=1 // pred_check_branch
      %188 = sbr.rel (0) target = $region25
    $region24: #{tpu_custom_call.1} parent=1 // pred_region
      %s190 = ssub.s32 128, 128
      %191 = vsyncadd [#allocation3], %s190
      %s193 = sshll.u32 [#allocation2], 4
      %s194 = int_to_ptr.vmem [resolvable:$true] %s193
      %196 = dma.vmem_to_hbm [thread:$0]  %s194, 128, %s5, [#allocation3]
    $region25: #{tpu_custom_call.1} parent=1 // pred_fallthru
      _
    // Predicated region
    $region26: #{tpu_custom_call.1} parent=1 // pred_check
      _
    $region27: #{tpu_custom_call.1} parent=1 // pred_check_branch
      %198 = sbr.rel (0) target = $region29
    $region28: #{tpu_custom_call.1} parent=1 // pred_region
      %199 = dma.done [#allocation3], 128
    $region29: #{tpu_custom_call.1} parent=1 // pred_fallthru
      _
    %200 = vsyncpa [#allocation3], 1

</llo_original>
